<compile_context>
chip_gen: v6e
topology: v6e:2x2x1
jax: 0.10.0
libtpu: 0.0.40
codegen_flags: <defaults>
</compile_context>

<pallas_src>
import jax
import jax.numpy as jnp
from jax.experimental import pallas as pl
from jax.experimental.pallas import tpu as pltpu

OBS_DIM = 6
ACT_DIM = 2
HL = [256, 512, 256]

OUT_COLS = ACT_DIM * 2     # real output width (4)
W4_PAD = 128               # final matmul N padded to one full lane group


def actor_kernel(x_ref,
                 w1_ref, b1_ref,
                 w2_ref, b2_ref,
                 w3_ref, b3_ref,
                 w4_ref, b4_ref,
                 o_ref):
    """One batch tile of the fused 4-layer MLP.

    Layer 1 runs in f32 (K=6 is tiny); layers 2-4 use bf16 weights /
    activations at the MXU inputs with f32 accumulation.  Bias adds and ReLU
    stay in f32 (safe on v5e's VPU).
    """
    # Layer 1: (tile, 6) f32 @ (6, 256) f32 -- Mosaic masks the K=6 contraction.
    h = jnp.dot(x_ref[...], w1_ref[...], preferred_element_type=jnp.float32)
    h = jnp.maximum(h + b1_ref[...], 0.0).astype(jnp.bfloat16)

    # Layer 2: (tile, 256) bf16 @ (256, 512) bf16 -> f32
    h = jnp.dot(h, w2_ref[...], preferred_element_type=jnp.float32)
    h = jnp.maximum(h + b2_ref[...], 0.0).astype(jnp.bfloat16)

    # Layer 3: (tile, 512) bf16 @ (512, 256) bf16 -> f32
    h = jnp.dot(h, w3_ref[...], preferred_element_type=jnp.float32)
    h = jnp.maximum(h + b3_ref[...], 0.0).astype(jnp.bfloat16)

    # Layer 4 (no activation): dense 128-col matmul, store only the real cols.
    out = jnp.dot(h, w4_ref[...], preferred_element_type=jnp.float32) + b4_ref[...]
    o_ref[...] = out[:, : o_ref.shape[1]]


def init_actor_params(key, obs_dim=OBS_DIM, act_dim=ACT_DIM, hl=HL):
    """PyTorch nn.Linear-style init: U(-1/sqrt(fan_in), 1/sqrt(fan_in)).

    Weights are stored as (in_features, out_features) == W^T of PyTorch's
    (out, in), so y = x @ W + b matches nn.Linear exactly.  Biases are
    (1, out_features) rows.
    """
    dims = [obs_dim] + list(hl) + [act_dim * 2]
    params = []
    for i in range(len(dims) - 1):
        fan_in, fan_out = dims[i], dims[i + 1]
        key, kw, kb = jax.random.split(key, 3)
        bound = 1.0 / float(fan_in) ** 0.5
        w = jax.random.uniform(kw, (fan_in, fan_out), jnp.float32, -bound, bound)
        b = jax.random.uniform(kb, (1, fan_out), jnp.float32, -bound, bound)
        params.append((w, b))
    return params


def prepare_actor_params(params):
    """One-time conversion of f32 (in, out) params to the kernel layout
    (do this once and reuse across calls, e.g. every RL step):
      * layer 1 kept f32 (6x256 is tiny; lets x stay unpadded at 6 columns)
      * layers 2-4 weights cast to bf16
      * layer 4 weight/bias N-padded 4 -> 128 for a dense final matmul
    Biases stay f32 (elementwise math is f32 on all chips)."""
    (w1, b1), (w2, b2), (w3, b3), (w4, b4) = params
    w4p = jnp.zeros((w4.shape[0], W4_PAD), jnp.float32).at[:, : w4.shape[1]].set(w4)
    b4p = jnp.zeros((1, W4_PAD), jnp.float32).at[:, : b4.shape[1]].set(b4)
    return [
        (w1, b1),
        (w2.astype(jnp.bfloat16), b2),
        (w3.astype(jnp.bfloat16), b3),
        (w4p.astype(jnp.bfloat16), b4p),
    ]


def _round_up(n, m):
    return ((n + m - 1) // m) * m


def _choose_tiling(batch, batch_tile):
    """Adaptive batch tiling.

    * batch <= batch_tile: one grid step of round_up(batch, 8) rows.
    * larger: ~batch_tile rows per step, with an even number of tiles so
      v7x's two TensorCores can split the "parallel" grid axis evenly.
    """
    if batch <= batch_tile:
        tile = _round_up(max(batch, 1), 8)
        n_tiles = 1
    else:
        n_tiles = -(-batch // batch_tile)
        if n_tiles % 2:
            n_tiles += 1
        tile = _round_up(-(-batch // n_tiles), 8)
        n_tiles = -(-batch // tile)
    return tile, n_tiles


def actor_forward(x, kernel_params, *, batch_tile=1024):
    """x: (batch, obs_dim=6) f32.  Returns (batch, act_dim*2=4) f32."""
    batch, obs_dim = x.shape
    tile, n_tiles = _choose_tiling(batch, batch_tile)
    padded_batch = tile * n_tiles

    # Only the batch axis is (maybe) padded; x keeps its real 6 columns
    # (no obs-dim pad copy in the wrapper).  Padded zero rows produce garbage
    # outputs that are sliced away below (no in-kernel batch reductions).
    if padded_batch != batch:
        x_in = jnp.pad(x, ((0, padded_batch - batch), (0, 0)))
    else:
        x_in = x

    def resident(shape):
        # Constant block index => stays VMEM-resident across grid steps.
        return pl.BlockSpec(shape, lambda i: (0,) * len(shape))

    in_specs = [pl.BlockSpec((tile, obs_dim), lambda i: (i, 0))]
    flat_args = [x_in]
    for w, b in kernel_params:
        in_specs += [resident(w.shape), resident(b.shape)]
        flat_args += [w, b]

    # Advisory cost model: the kernel is weight-bandwidth / launch bound.
    weight_bytes = sum(int(w.size) * w.dtype.itemsize + int(b.size) * b.dtype.itemsize
                       for w, b in kernel_params)
    flops_per_row = 2 * sum(int(w.shape[0]) * int(w.shape[1]) for w, _ in kernel_params)
    cost = pl.CostEstimate(
        flops=flops_per_row * padded_batch,
        transcendentals=0,
        bytes_accessed=weight_bytes + padded_batch * (obs_dim + OUT_COLS) * 4,
    )

    out = pl.pallas_call(
        actor_kernel,
        out_shape=jax.ShapeDtypeStruct((padded_batch, OUT_COLS), jnp.float32),
        grid=(n_tiles,),
        in_specs=in_specs,
        out_specs=pl.BlockSpec((tile, OUT_COLS), lambda i: (i, 0)),
        compiler_params=pltpu.CompilerParams(
            dimension_semantics=("parallel",),
            # Large batch tiles (f32 intermediates) must also fit under
            # v5e's 16 MiB default scoped-VMEM limit; 32 MiB is safe on all.
            vmem_limit_bytes=32 * 1024 * 1024,
        ),
        cost_estimate=cost,
    )(*flat_args)

    return out[:batch] if padded_batch != batch else out


def actor_forward_ref_f32(x, params):
    """Plain-JAX f32 reference (original PyTorch module semantics)."""
    h = x
    for i, (w, b) in enumerate(params):
        h = h @ w + b
        if i < len(params) - 1:
            h = jnp.maximum(h, 0.0)
    return h


def actor_forward_ref_kernel_math(x, params):
    """Reference mirroring the kernel math (f32 layer 1, bf16 MXU inputs
    on layers 2-4, f32 accumulation / elementwise)."""
    (w1, b1), (w2, b2), (w3, b3), (w4, b4) = params
    h = jnp.maximum(jnp.dot(x, w1, preferred_element_type=jnp.float32) + b1, 0.0)
    h = h.astype(jnp.bfloat16)
    h = jnp.maximum(jnp.dot(h, w2.astype(jnp.bfloat16),
                            preferred_element_type=jnp.float32) + b2, 0.0)
    h = h.astype(jnp.bfloat16)
    h = jnp.maximum(jnp.dot(h, w3.astype(jnp.bfloat16),
                            preferred_element_type=jnp.float32) + b3, 0.0)
    h = h.astype(jnp.bfloat16)
    return jnp.dot(h, w4.astype(jnp.bfloat16),
                   preferred_element_type=jnp.float32) + b4


if __name__ == "__main__":
    key = jax.random.PRNGKey(0)
    k_params, k_x, k_x2 = jax.random.split(key, 3)

    params = init_actor_params(k_params)            # PyTorch-equivalent f32 params
    kernel_params = prepare_actor_params(params)    # kernel layout (made once, reused)

    # --- Small RL-sized batch (latency path: single 8-row tile) ---
    batch = 2
    x = jax.random.normal(k_x, (batch, OBS_DIM), jnp.float32)
    out = jax.block_until_ready(actor_forward(x, kernel_params))
    assert out.shape == (batch, ACT_DIM * 2), out.shape

    ref_k = actor_forward_ref_kernel_math(x, params)
    assert jnp.allclose(out, ref_k, atol=1e-2, rtol=1e-2), (
        "mismatch vs kernel-math reference: max abs err "
        f"{float(jnp.max(jnp.abs(out - ref_k)))}")

    ref_f = actor_forward_ref_f32(x, params)
    assert jnp.allclose(out, ref_f, atol=5e-2, rtol=5e-2), (
        "mismatch vs f32 reference: max abs err "
        f"{float(jnp.max(jnp.abs(out - ref_f)))}")

    # --- Larger batch (multi-tile path: even tile count + row padding) ---
    batch2 = 2500
    x2 = jax.random.normal(k_x2, (batch2, OBS_DIM), jnp.float32)
    out2 = jax.block_until_ready(actor_forward(x2, kernel_params))
    assert out2.shape == (batch2, ACT_DIM * 2), out2.shape
    ref_k2 = actor_forward_ref_kernel_math(x2, params)
    assert jnp.allclose(out2, ref_k2, atol=1e-2, rtol=1e-2), (
        "large-batch mismatch vs kernel-math reference: max abs err "
        f"{float(jnp.max(jnp.abs(out2 - ref_k2)))}")

    print("KERNEL_OK")
</pallas_src>

<mosaic_0001>
module attributes {stable_mosaic.version = 11 : i64} {
  func.func @actor_kernel(%arg0: i32, %arg1: memref<8x6xf32, #tpu.memory_space<vmem>>, %arg2: memref<6x256xf32, #tpu.memory_space<vmem>>, %arg3: memref<1x256xf32, #tpu.memory_space<vmem>>, %arg4: memref<256x512xbf16, #tpu.memory_space<vmem>>, %arg5: memref<1x512xf32, #tpu.memory_space<vmem>>, %arg6: memref<512x256xbf16, #tpu.memory_space<vmem>>, %arg7: memref<1x256xf32, #tpu.memory_space<vmem>>, %arg8: memref<256x128xbf16, #tpu.memory_space<vmem>>, %arg9: memref<1x128xf32, #tpu.memory_space<vmem>>, %arg10: memref<8x4xf32, #tpu.memory_space<vmem>>) attributes {dimension_semantics = [#tpu.dimension_semantics<parallel>], iteration_bounds = array<i64: 1>, scalar_prefetch = 0 : i64, scratch_operands = 0 : i64, tpu.core_type = #tpu.core_type<tc>, window_params = [{transform_indices = @transform_0, window_bounds = array<i64: 8, 6>}, {pipeline_mode = #tpu.pipeline_mode<synchronous>, transform_indices = @transform_1, window_bounds = array<i64: 6, 256>}, {pipeline_mode = #tpu.pipeline_mode<synchronous>, transform_indices = @transform_2, window_bounds = array<i64: 1, 256>}, {pipeline_mode = #tpu.pipeline_mode<synchronous>, transform_indices = @transform_3, window_bounds = array<i64: 256, 512>}, {pipeline_mode = #tpu.pipeline_mode<synchronous>, transform_indices = @transform_4, window_bounds = array<i64: 1, 512>}, {pipeline_mode = #tpu.pipeline_mode<synchronous>, transform_indices = @transform_5, window_bounds = array<i64: 512, 256>}, {pipeline_mode = #tpu.pipeline_mode<synchronous>, transform_indices = @transform_6, window_bounds = array<i64: 1, 256>}, {pipeline_mode = #tpu.pipeline_mode<synchronous>, transform_indices = @transform_7, window_bounds = array<i64: 256, 128>}, {pipeline_mode = #tpu.pipeline_mode<synchronous>, transform_indices = @transform_8, window_bounds = array<i64: 1, 128>}, {transform_indices = @transform_9, window_bounds = array<i64: 8, 4>}]} {
    %c0 = arith.constant 0 : index
    %c0_0 = arith.constant 0 : index
    %0 = vector.load %arg1[%c0, %c0_0] : memref<8x6xf32, #tpu.memory_space<vmem>>, vector<8x6xf32>
    %c0_1 = arith.constant 0 : index
    %c0_2 = arith.constant 0 : index
    %1 = vector.load %arg2[%c0_1, %c0_2] : memref<6x256xf32, #tpu.memory_space<vmem>>, vector<6x256xf32>
    %cst = arith.constant dense<0.000000e+00> : vector<8x256xf32>
    %2 = tpu.matmul %0, %1, %cst {dimension_numbers = #tpu.dot_dimension_numbers<[1], [0], [0], [1], [0, 0, 1, 1], [], []>} : vector<8x6xf32>, vector<6x256xf32>, vector<8x256xf32> -> vector<8x256xf32>
    %c0_3 = arith.constant 0 : index
    %c0_4 = arith.constant 0 : index
    %3 = vector.load %arg3[%c0_3, %c0_4] : memref<1x256xf32, #tpu.memory_space<vmem>>, vector<1x256xf32>
    %4 = vector.broadcast %3 : vector<1x256xf32> to vector<8x256xf32>
    %5 = arith.addf %2, %4 : vector<8x256xf32>
    %cst_5 = arith.constant 0.000000e+00 : f32
    %6 = vector.broadcast %cst_5 : f32 to vector<8x256xf32>
    %7 = arith.maximumf %5, %6 : vector<8x256xf32>
    %8 = arith.truncf %7 : vector<8x256xf32> to vector<8x256xbf16>
    %c0_6 = arith.constant 0 : index
    %c0_7 = arith.constant 0 : index
    %9 = vector.load %arg4[%c0_6, %c0_7] : memref<256x512xbf16, #tpu.memory_space<vmem>>, vector<256x512xbf16>
    %cst_8 = arith.constant dense<0.000000e+00> : vector<8x512xf32>
    %10 = tpu.matmul %8, %9, %cst_8 {dimension_numbers = #tpu.dot_dimension_numbers<[1], [0], [0], [1], [0, 0, 1, 1], [], []>} : vector<8x256xbf16>, vector<256x512xbf16>, vector<8x512xf32> -> vector<8x512xf32>
    %c0_9 = arith.constant 0 : index
    %c0_10 = arith.constant 0 : index
    %11 = vector.load %arg5[%c0_9, %c0_10] : memref<1x512xf32, #tpu.memory_space<vmem>>, vector<1x512xf32>
    %12 = vector.broadcast %11 : vector<1x512xf32> to vector<8x512xf32>
    %13 = arith.addf %10, %12 : vector<8x512xf32>
    %cst_11 = arith.constant 0.000000e+00 : f32
    %14 = vector.broadcast %cst_11 : f32 to vector<8x512xf32>
    %15 = arith.maximumf %13, %14 : vector<8x512xf32>
    %16 = arith.truncf %15 : vector<8x512xf32> to vector<8x512xbf16>
    %c0_12 = arith.constant 0 : index
    %c0_13 = arith.constant 0 : index
    %17 = vector.load %arg6[%c0_12, %c0_13] : memref<512x256xbf16, #tpu.memory_space<vmem>>, vector<512x256xbf16>
    %cst_14 = arith.constant dense<0.000000e+00> : vector<8x256xf32>
    %18 = tpu.matmul %16, %17, %cst_14 {dimension_numbers = #tpu.dot_dimension_numbers<[1], [0], [0], [1], [0, 0, 1, 1], [], []>} : vector<8x512xbf16>, vector<512x256xbf16>, vector<8x256xf32> -> vector<8x256xf32>
    %c0_15 = arith.constant 0 : index
    %c0_16 = arith.constant 0 : index
    %19 = vector.load %arg7[%c0_15, %c0_16] : memref<1x256xf32, #tpu.memory_space<vmem>>, vector<1x256xf32>
    %20 = vector.broadcast %19 : vector<1x256xf32> to vector<8x256xf32>
    %21 = arith.addf %18, %20 : vector<8x256xf32>
    %cst_17 = arith.constant 0.000000e+00 : f32
    %22 = vector.broadcast %cst_17 : f32 to vector<8x256xf32>
    %23 = arith.maximumf %21, %22 : vector<8x256xf32>
    %24 = arith.truncf %23 : vector<8x256xf32> to vector<8x256xbf16>
    %c0_18 = arith.constant 0 : index
    %c0_19 = arith.constant 0 : index
    %25 = vector.load %arg8[%c0_18, %c0_19] : memref<256x128xbf16, #tpu.memory_space<vmem>>, vector<256x128xbf16>
    %cst_20 = arith.constant dense<0.000000e+00> : vector<8x128xf32>
    %26 = tpu.matmul %24, %25, %cst_20 {dimension_numbers = #tpu.dot_dimension_numbers<[1], [0], [0], [1], [0, 0, 1, 1], [], []>} : vector<8x256xbf16>, vector<256x128xbf16>, vector<8x128xf32> -> vector<8x128xf32>
    %c0_21 = arith.constant 0 : index
    %c0_22 = arith.constant 0 : index
    %27 = vector.load %arg9[%c0_21, %c0_22] : memref<1x128xf32, #tpu.memory_space<vmem>>, vector<1x128xf32>
    %28 = vector.broadcast %27 : vector<1x128xf32> to vector<8x128xf32>
    %29 = arith.addf %26, %28 : vector<8x128xf32>
    %30 = vector.extract_strided_slice %29 {offsets = [0, 0], sizes = [8, 4], strides = [1, 1]} : vector<8x128xf32> to vector<8x4xf32>
    %c0_23 = arith.constant 0 : index
    %c0_24 = arith.constant 0 : index
    %31 = vector.load %arg10[%c0_23, %c0_24] : memref<8x4xf32, #tpu.memory_space<vmem>>, vector<8x4xf32>
    tpu.vector_store %arg10[%c0_23, %c0_24], %30 {strides = array<i32>} : memref<8x4xf32, #tpu.memory_space<vmem>>, vector<8x4xf32>,
    return
  }
  func.func @transform_0(%arg0: i32) -> (i32, i32) {
    %c0_i32 = arith.constant 0 : i32
    %c0_i32_0 = arith.constant 0 : i32
    return %arg0, %c0_i32 : i32, i32
  }
  func.func @transform_1(%arg0: i32) -> (i32, i32) {
    %c0_i32 = arith.constant 0 : i32
    %c0_i32_0 = arith.constant 0 : i32
    %c0_i32_1 = arith.constant 0 : i32
    return %c0_i32, %c0_i32_0 : i32, i32
  }
  func.func @transform_2(%arg0: i32) -> (i32, i32) {
    %c0_i32 = arith.constant 0 : i32
    %c0_i32_0 = arith.constant 0 : i32
    %c0_i32_1 = arith.constant 0 : i32
    return %c0_i32, %c0_i32_0 : i32, i32
  }
  func.func @transform_3(%arg0: i32) -> (i32, i32) {
    %c0_i32 = arith.constant 0 : i32
    %c0_i32_0 = arith.constant 0 : i32
    %c0_i32_1 = arith.constant 0 : i32
    return %c0_i32, %c0_i32_0 : i32, i32
  }
  func.func @transform_4(%arg0: i32) -> (i32, i32) {
    %c0_i32 = arith.constant 0 : i32
    %c0_i32_0 = arith.constant 0 : i32
    %c0_i32_1 = arith.constant 0 : i32
    return %c0_i32, %c0_i32_0 : i32, i32
  }
  func.func @transform_5(%arg0: i32) -> (i32, i32) {
    %c0_i32 = arith.constant 0 : i32
    %c0_i32_0 = arith.constant 0 : i32
    %c0_i32_1 = arith.constant 0 : i32
    return %c0_i32, %c0_i32_0 : i32, i32
  }
  func.func @transform_6(%arg0: i32) -> (i32, i32) {
    %c0_i32 = arith.constant 0 : i32
    %c0_i32_0 = arith.constant 0 : i32
    %c0_i32_1 = arith.constant 0 : i32
    return %c0_i32, %c0_i32_0 : i32, i32
  }
  func.func @transform_7(%arg0: i32) -> (i32, i32) {
    %c0_i32 = arith.constant 0 : i32
    %c0_i32_0 = arith.constant 0 : i32
    %c0_i32_1 = arith.constant 0 : i32
    return %c0_i32, %c0_i32_0 : i32, i32
  }
  func.func @transform_8(%arg0: i32) -> (i32, i32) {
    %c0_i32 = arith.constant 0 : i32
    %c0_i32_0 = arith.constant 0 : i32
    %c0_i32_1 = arith.constant 0 : i32
    return %c0_i32, %c0_i32_0 : i32, i32
  }
  func.func @transform_9(%arg0: i32) -> (i32, i32) {
    %c0_i32 = arith.constant 0 : i32
    %c0_i32_0 = arith.constant 0 : i32
    return %arg0, %c0_i32 : i32, i32
  }
}

</mosaic_0001>

<llo_original>
// kernel: tpu_custom_call.1
$region0: #{tpu_custom_call.1}
  #allocation0 [shape = 'u32[]', space=smem, size = 0x4, offset = 0x4, fixed_abs, tag = 'smem constant byte address 0x4 - core index']
  #allocation1 [shape = 'u32[144,128]{1,0:T(1,128)}', space=vmem, size = 0x12000, scoped, tag = 'internal scratch']
  %s0 = inlined_call_operand.hbm [shape: f32[8,6], index: 0, kind: input, shape index: {}]
  %s1 = inlined_call_operand.hbm [shape: f32[6,256], index: 1, kind: input, shape index: {}]
  %s2 = inlined_call_operand.vmem [shape: f32[1,256], index: 2, kind: input, shape index: {}]
  %s3 = inlined_call_operand.hbm [shape: bf16[256,512], index: 3, kind: input, shape index: {}]
  %s4 = inlined_call_operand.vmem [shape: f32[1,512], index: 4, kind: input, shape index: {}]
  %s5 = inlined_call_operand.hbm [shape: bf16[512,256], index: 5, kind: input, shape index: {}]
  %s6 = inlined_call_operand.vmem [shape: f32[1,256], index: 6, kind: input, shape index: {}]
  %s7 = inlined_call_operand.hbm [shape: bf16[256,128], index: 7, kind: input, shape index: {}]
  %s8 = inlined_call_operand.vmem [shape: f32[1,128], index: 8, kind: input, shape index: {}]
  %s9 = inlined_call_operand.vmem [shape: f32[8,4], index: 9, kind: output, shape index: {}]
  %s10 = sld [smem:[#allocation0]]
  $region66: #{tpu_custom_call.1} parent=0
    _
  %s12 = ssub.s32 1, %s10
  %s13 = scalar_select 0, %s12, %s10
  $region1: #{tpu_custom_call.1} parent=0
    #allocation2 [shape = 'u8[4096]{0}', space=vmem, size = 0x1000, scoped, tag = 'input window, operand 0, single buffered']
    #allocation3 [shape = 's32[1]{0}', space=sflag, size = 0x4, scoped, tag = 'scoped memory for tpu_custom_call.1']
    #allocation4 [shape = 'u8[8192]{0}', space=vmem, size = 0x2000, scoped, tag = 'input window, operand 1, single buffered']
    #allocation5 [shape = 's32[1]{0}', space=sflag, size = 0x4, scoped, tag = 'scoped memory for tpu_custom_call.1']
    #allocation6 [shape = 'u8[262144]{0}', space=vmem, size = 0x40000, scoped, tag = 'input window, operand 3, single buffered']
    #allocation7 [shape = 'u8[262144]{0}', space=vmem, size = 0x40000, scoped, tag = 'input window, operand 5, single buffered']
    #allocation8 [shape = 's32[1]{0}', space=sflag, size = 0x4, scoped, tag = 'scoped memory for tpu_custom_call.1']
    #allocation9 [shape = 'u8[65536]{0}', space=vmem, size = 0x10000, scoped, tag = 'input window, operand 7, single buffered']
    %14 = vsyncpa [#allocation3], 0
    %15 = vsyncpa [#allocation5], 0
    %16 = vsyncpa [#allocation8], 0
    // Predicated region
    $region2: #{tpu_custom_call.1} parent=1 // pred_check
      _
    $region3: #{tpu_custom_call.1} parent=1 // pred_check_branch
      %18 = sbr.rel (0) target = $region5
    $region4: #{tpu_custom_call.1} parent=1 // pred_region
      %s20 = ssub.s32 128, 128
      %21 = vsyncadd [#allocation3], %s20
      %s23 = sshll.u32 [#allocation2], 4
      %s24 = int_to_ptr.vmem [resolvable:$true] %s23
      %26 = dma.hbm_to_vmem [thread:$0]  %s0, 128, %s24, [#allocation3]
    $region5: #{tpu_custom_call.1} parent=1 // pred_fallthru
      _
    // Predicated region
    $region6: #{tpu_custom_call.1} parent=1 // pred_check
      _
    $region7: #{tpu_custom_call.1} parent=1 // pred_check_branch
      %28 = sbr.rel (0) target = $region9
    $region8: #{tpu_custom_call.1} parent=1 // pred_region
      %s30 = ssub.s32 256, 256
      %31 = vsyncadd [#allocation5], %s30
      %s33 = sshll.u32 [#allocation4], 4
      %s34 = int_to_ptr.vmem [resolvable:$true] %s33
      %36 = dma.hbm_to_vmem [thread:$0]  %s1, 256, %s34, [#allocation5]
    $region9: #{tpu_custom_call.1} parent=1 // pred_fallthru
      _
    // Predicated region
    $region10: #{tpu_custom_call.1} parent=1 // pred_check
      _
    $region11: #{tpu_custom_call.1} parent=1 // pred_check_branch
      %38 = sbr.rel (0) target = $region13
    $region12: #{tpu_custom_call.1} parent=1 // pred_region
      _
    $region13: #{tpu_custom_call.1} parent=1 // pred_fallthru
      _
    // Predicated region
    $region14: #{tpu_custom_call.1} parent=1 // pred_check
      _
    $region15: #{tpu_custom_call.1} parent=1 // pred_check_branch
      %40 = sbr.rel (0) target = $region17
    $region16: #{tpu_custom_call.1} parent=1 // pred_region
      %s42 = ssub.s32 8192, 8192
      %43 = vsyncadd [#allocation5], %s42
      %s44 = sshll.u32 [#allocation6], 4
      %s45 = int_to_ptr.vmem [resolvable:$true] %s44
      %50 = dma.hbm_to_vmem [thread:$0]  %s3, 8192, %s45, [#allocation5], 256, 256, 16
    $region17: #{tpu_custom_call.1} parent=1 // pred_fallthru
      _
    // Predicated region
    $region18: #{tpu_custom_call.1} parent=1 // pred_check
      _
    $region19: #{tpu_custom_call.1} parent=1 // pred_check_branch
      %52 = sbr.rel (0) target = $region21
    $region20: #{tpu_custom_call.1} parent=1 // pred_region
      _
    $region21: #{tpu_custom_call.1} parent=1 // pred_fallthru
      _
    // Predicated region
    $region22: #{tpu_custom_call.1} parent=1 // pred_check
      _
    $region23: #{tpu_custom_call.1} parent=1 // pred_check_branch
      %54 = sbr.rel (0) target = $region25
    $region24: #{tpu_custom_call.1} parent=1 // pred_region
      %s56 = ssub.s32 8192, 8192
      %57 = vsyncadd [#allocation8], %s56
      %s58 = sshll.u32 [#allocation7], 4
      %s59 = int_to_ptr.vmem [resolvable:$true] %s58
      %64 = dma.hbm_to_vmem [thread:$0]  %s5, 8192, %s59, [#allocation8], 128, 128, 8
    $region25: #{tpu_custom_call.1} parent=1 // pred_fallthru
      _
    // Predicated region
    $region26: #{tpu_custom_call.1} parent=1 // pred_check
      _
    $region27: #{tpu_custom_call.1} parent=1 // pred_check_branch
      %66 = sbr.rel (0) target = $region29
    $region28: #{tpu_custom_call.1} parent=1 // pred_region
      _
    $region29: #{tpu_custom_call.1} parent=1 // pred_fallthru
      _
    // Predicated region
    $region30: #{tpu_custom_call.1} parent=1 // pred_check
      _
    $region31: #{tpu_custom_call.1} parent=1 // pred_check_branch
      %68 = sbr.rel (0) target = $region33
    $region32: #{tpu_custom_call.1} parent=1 // pred_region
      %s70 = ssub.s32 2048, 2048
      %71 = vsyncadd [#allocation8], %s70
      %s72 = sshll.u32 [#allocation9], 4
      %s73 = int_to_ptr.vmem [resolvable:$true] %s72
      %78 = dma.hbm_to_vmem [thread:$0]  %s7, 2048, %s73, [#allocation8], 64, 64, 4
    $region33: #{tpu_custom_call.1} parent=1 // pred_fallthru
      _
    // Predicated region
    $region34: #{tpu_custom_call.1} parent=1 // pred_check
      _
    $region35: #{tpu_custom_call.1} parent=1 // pred_check_branch
      %80 = sbr.rel (0) target = $region37
    $region36: #{tpu_custom_call.1} parent=1 // pred_region
      _
    $region37: #{tpu_custom_call.1} parent=1 // pred_fallthru
      _
    // Predicated region
    $region38: #{tpu_custom_call.1} parent=1 // pred_check
      _
    $region39: #{tpu_custom_call.1} parent=1 // pred_check_branch
      %82 = sbr.rel (0) target = $region41
    $region40: #{tpu_custom_call.1} parent=1 // pred_region
      %83 = dma.done [#allocation3], 128
    $region41: #{tpu_custom_call.1} parent=1 // pred_fallthru
      _
    // Predicated region
    $region42: #{tpu_custom_call.1} parent=1 // pred_check
      _
    $region43: #{tpu_custom_call.1} parent=1 // pred_check_branch
      %85 = sbr.rel (0) target = $region45
    $region44: #{tpu_custom_call.1} parent=1 // pred_region
      %86 = dma.done [#allocation5], 256
    $region45: #{tpu_custom_call.1} parent=1 // pred_fallthru
      _
    // Predicated region
    $region46: #{tpu_custom_call.1} parent=1 // pred_check
      _
    $region47: #{tpu_custom_call.1} parent=1 // pred_check_branch
      %88 = sbr.rel (0) target = $region49
    $region48: #{tpu_custom_call.1} parent=1 // pred_region
      %89 = dma.done [#allocation5], 8192
    $region49: #{tpu_custom_call.1} parent=1 // pred_fallthru
      _
    // Predicated region
    $region50: #{tpu_custom_call.1} parent=1 // pred_check
      _
    $region51: #{tpu_custom_call.1} parent=1 // pred_check_branch
      %91 = sbr.rel (0) target = $region53
    $region52: #{tpu_custom_call.1} parent=1 // pred_region
      %92 = dma.done [#allocation8], 8192
    $region53: #{tpu_custom_call.1} parent=1 // pred_fallthru
      _
    // Predicated region
    $region54: #{tpu_custom_call.1} parent=1 // pred_check
      _
    $region55: #{tpu_custom_call.1} parent=1 // pred_check_branch
      %94 = sbr.rel (0) target = $region57
    $region56: #{tpu_custom_call.1} parent=1 // pred_region
      %95 = dma.done [#allocation8], 2048
    $region57: #{tpu_custom_call.1} parent=1 // pred_fallthru
      _
    %v97 = vld [vmem:[#allocation2] sm:$0xff]
    %v98 = vld [vmem:[#allocation4] sm:$0x3f]
    %v99 = vld [vmem:[#allocation4 + $0x8] sm:$0x3f]
    %v100 = vld [vmem:[%s2] sm:$0x3]
    %v102 = vlaneseq
    %v103 = vshrl.u32 %v102, 7
    %v104 = vsub.s32 0, %v103
    %v105 = vrot.slane %v100, %v104
    %v106 = vlaneseq
    %v107 = vshrl.u32 %v106, 7
    %v108 = vsub.s32 1, %v107
    %v109 = vrot.slane %v100, %v108
    %vm112 = vcmask 48128
    %v114 = vsel %vm112, %v97, 0
    %vm116 = vcmask 1045504
    %v118 = vsel %vm116, %v98, 0
    %v121 = vsel %vm116, %v99, 0
    %123 = vmatprep.subr.mxu0 0.0
    %124 = vmatpush1.msra.mxu0 0.0
    %125 = vmatprep.subr.mxu0 0.0
    %126 = vmatpush1.msra.mxu0 0.0
    %127 = vmatprep.subr.mxu0 0.0
    %128 = vmatpush1.msra.mxu0 0.0
    %129 = vmatprep.subr.mxu0 0.0
    %130 = vmatpush1.msra.mxu0 0.0
    %131 = vmatprep.subr.mxu0 0.0
    %132 = vmatpush1.msra.mxu0 0.0
    %133 = vmatprep.subr.mxu0 0.0
    %134 = vmatpush1.msra.mxu0 0.0
    %135 = vmatprep.subr.mxu0 0.0
    %136 = vmatpush1.msra.mxu0 0.0
    %137 = vmatprep.subr.mxu0 0.0
    %138 = vmatpush1.msra.mxu0 0.0
    %139 = vmatprep.subr.mxu0 0.0
    %140 = vmatpush1.msra.mxu0 0.0
    %141 = vmatprep.subr.mxu0 0.0
    %142 = vmatpush1.msra.mxu0 0.0
    %143 = vmatprep.subr.mxu0 0.0
    %144 = vmatpush1.msra.mxu0 0.0
    %145 = vmatprep.subr.mxu0 0.0
    %146 = vmatpush1.msra.mxu0 0.0
    %147 = vmatprep.subr.mxu0 0.0
    %148 = vmatpush1.msra.mxu0 0.0
    %149 = vmatprep.subr.mxu0 0.0
    %150 = vmatpush1.msra.mxu0 0.0
    %151 = vmatprep.subr.mxu0 0.0
    %152 = vmatpush1.msra.mxu0 0.0
    %153 = vmatprep.subr.mxu0 %v121
    %154 = vmatpush1.msra.mxu0 %v118
    %155 = vmatprep.subr.mxu0 0.0
    %156 = vmatpush2.msra.mxu0 0.0
    %157 = vmatprep.subr.mxu0 0.0
    %158 = vmatpush2.msra.mxu0 0.0
    %159 = vmatprep.subr.mxu0 0.0
    %160 = vmatpush2.msra.mxu0 0.0
    %161 = vmatprep.subr.mxu0 0.0
    %162 = vmatpush2.msra.mxu0 0.0
    %163 = vmatprep.subr.mxu0 0.0
    %164 = vmatpush2.msra.mxu0 0.0
    %165 = vmatprep.subr.mxu0 0.0
    %166 = vmatpush2.msra.mxu0 0.0
    %167 = vmatprep.subr.mxu0 0.0
    %168 = vmatpush2.msra.mxu0 0.0
    %169 = vmatprep.subr.mxu0 0.0
    %170 = vmatpush2.msra.mxu0 0.0
    %171 = vmatprep.subr.mxu0 0.0
    %172 = vmatpush2.msra.mxu0 0.0
    %173 = vmatprep.subr.mxu0 0.0
    %174 = vmatpush2.msra.mxu0 0.0
    %175 = vmatprep.subr.mxu0 0.0
    %176 = vmatpush2.msra.mxu0 0.0
    %177 = vmatprep.subr.mxu0 0.0
    %178 = vmatpush2.msra.mxu0 0.0
    %179 = vmatprep.subr.mxu0 0.0
    %180 = vmatpush2.msra.mxu0 0.0
    %181 = vmatprep.subr.mxu0 0.0
    %182 = vmatpush2.msra.mxu0 0.0
    %183 = vmatprep.subr.mxu0 0.0
    %184 = vmatpush2.msra.mxu0 0.0
    %185 = vmatprep.subr.mxu0 0.0
    %186 = vmatpush2.msra.mxu0 0.0
    %187 = vmatprep.mubr.f32.mxu0 0.0
    %188 = vmatmul.mubr.f32.gmra.mxu0 %v114
    %v189 = vpop.f32.mrf.mxu0
    %v190 = vadd.f32 %v105, %v189
    %v191 = vpop.f32.mrf.mxu0
    %v192 = vadd.f32 %v109, %v191
    %193 = vdwg.mxu0
    %v194 = vmax.f32 %v190, 0.0
    %v195 = vmax.f32 %v192, 0.0
    %v196 = vpack.c.bf16 %v194, %v194
    %v197 = vpack.c.bf16 %v195, %v195
    %v198 = vld [vmem:[#allocation6] sm:$0xff]
    %v199 = vld [vmem:[#allocation6 + $0x8] sm:$0xff]
    %v200 = vld [vmem:[#allocation6 + $0x10] sm:$0xff]
    %v201 = vld [vmem:[#allocation6 + $0x18] sm:$0xff]
    %v202 = vld [vmem:[#allocation6 + $0x20] sm:$0xff]
    %v203 = vld [vmem:[#allocation6 + $0x28] sm:$0xff]
    %v204 = vld [vmem:[#allocation6 + $0x30] sm:$0xff]
    %v205 = vld [vmem:[#allocation6 + $0x38] sm:$0xff]
    %v206 = vld [vmem:[#allocation6 + $0x40] sm:$0xff]
    %v207 = vld [vmem:[#allocation6 + $0x48] sm:$0xff]
    %v208 = vld [vmem:[#allocation6 + $0x50] sm:$0xff]
    %v209 = vld [vmem:[#allocation6 + $0x58] sm:$0xff]
    %v210 = vld [vmem:[#allocation6 + $0x60] sm:$0xff]
    %v211 = vld [vmem:[#allocation6 + $0x68] sm:$0xff]
    %v212 = vld [vmem:[#allocation6 + $0x70] sm:$0xff]
    %v213 = vld [vmem:[#allocation6 + $0x78] sm:$0xff]
    %v214 = vld [vmem:[#allocation6 + $0x80] sm:$0xff]
    %v215 = vld [vmem:[#allocation6 + $0x88] sm:$0xff]
    %v216 = vld [vmem:[#allocation6 + $0x90] sm:$0xff]
    %v217 = vld [vmem:[#allocation6 + $0x98] sm:$0xff]
    %v218 = vld [vmem:[#allocation6 + $0xa0] sm:$0xff]
    %v219 = vld [vmem:[#allocation6 + $0xa8] sm:$0xff]
    %v220 = vld [vmem:[#allocation6 + $0xb0] sm:$0xff]
    %v221 = vld [vmem:[#allocation6 + $0xb8] sm:$0xff]
    %v222 = vld [vmem:[#allocation6 + $0xc0] sm:$0xff]
    %v223 = vld [vmem:[#allocation6 + $0xc8] sm:$0xff]
    %v224 = vld [vmem:[#allocation6 + $0xd0] sm:$0xff]
    %v225 = vld [vmem:[#allocation6 + $0xd8] sm:$0xff]
    %v226 = vld [vmem:[#allocation6 + $0xe0] sm:$0xff]
    %v227 = vld [vmem:[#allocation6 + $0xe8] sm:$0xff]
    %v228 = vld [vmem:[#allocation6 + $0xf0] sm:$0xff]
    %v229 = vld [vmem:[#allocation6 + $0xf8] sm:$0xff]
    %v230 = vld [vmem:[#allocation6 + $0x100] sm:$0xff]
    %v231 = vld [vmem:[#allocation6 + $0x108] sm:$0xff]
    %v232 = vld [vmem:[#allocation6 + $0x110] sm:$0xff]
    %v233 = vld [vmem:[#allocation6 + $0x118] sm:$0xff]
    %v234 = vld [vmem:[#allocation6 + $0x120] sm:$0xff]
    %v235 = vld [vmem:[#allocation6 + $0x128] sm:$0xff]
    %v236 = vld [vmem:[#allocation6 + $0x130] sm:$0xff]
    %v237 = vld [vmem:[#allocation6 + $0x138] sm:$0xff]
    %v238 = vld [vmem:[#allocation6 + $0x140] sm:$0xff]
    %v239 = vld [vmem:[#allocation6 + $0x148] sm:$0xff]
    %v240 = vld [vmem:[#allocation6 + $0x150] sm:$0xff]
    %v241 = vld [vmem:[#allocation6 + $0x158] sm:$0xff]
    %v242 = vld [vmem:[#allocation6 + $0x160] sm:$0xff]
    %v243 = vld [vmem:[#allocation6 + $0x168] sm:$0xff]
    %v244 = vld [vmem:[#allocation6 + $0x170] sm:$0xff]
    %v245 = vld [vmem:[#allocation6 + $0x178] sm:$0xff]
    %v246 = vld [vmem:[#allocation6 + $0x180] sm:$0xff]
    %v247 = vld [vmem:[#allocation6 + $0x188] sm:$0xff]
    %v248 = vld [vmem:[#allocation6 + $0x190] sm:$0xff]
    %v249 = vld [vmem:[#allocation6 + $0x198] sm:$0xff]
    %v250 = vld [vmem:[#allocation6 + $0x1a0] sm:$0xff]
    %v251 = vld [vmem:[#allocation6 + $0x1a8] sm:$0xff]
    %v252 = vld [vmem:[#allocation6 + $0x1b0] sm:$0xff]
    %v253 = vld [vmem:[#allocation6 + $0x1b8] sm:$0xff]
    %v254 = vld [vmem:[#allocation6 + $0x1c0] sm:$0xff]
    %v255 = vld [vmem:[#allocation6 + $0x1c8] sm:$0xff]
    %v256 = vld [vmem:[#allocation6 + $0x1d0] sm:$0xff]
    %v257 = vld [vmem:[#allocation6 + $0x1d8] sm:$0xff]
    %v258 = vld [vmem:[#allocation6 + $0x1e0] sm:$0xff]
    %v259 = vld [vmem:[#allocation6 + $0x1e8] sm:$0xff]
    %v260 = vld [vmem:[#allocation6 + $0x1f0] sm:$0xff]
    %v261 = vld [vmem:[#allocation6 + $0x1f8] sm:$0xff]
    %v262 = vld [vmem:[%s4] sm:$0xf]
    %v264 = vlaneseq
    %v265 = vshrl.u32 %v264, 7
    %v266 = vsub.s32 0, %v265
    %v267 = vrot.slane %v262, %v266
    %v268 = vlaneseq
    %v269 = vshrl.u32 %v268, 7
    %v270 = vsub.s32 1, %v269
    %v271 = vrot.slane %v262, %v270
    %v272 = vlaneseq
    %v273 = vshrl.u32 %v272, 7
    %v274 = vsub.s32 2, %v273
    %v275 = vrot.slane %v262, %v274
    %v276 = vlaneseq
    %v277 = vshrl.u32 %v276, 7
    %v278 = vsub.s32 3, %v277
    %v279 = vrot.slane %v262, %v278
    %v348 = vunpack.c.l.b16 %v198
    %v349 = vunpack.c.h.b16 %v198
    %v350 = vunpack.c.l.b16 %v199
    %v351 = vunpack.c.h.b16 %v199
    %v352 = vunpack.c.l.b16 %v200
    %v353 = vunpack.c.h.b16 %v200
    %v354 = vunpack.c.l.b16 %v201
    %v355 = vunpack.c.h.b16 %v201
    %v356 = vunpack.c.l.b16 %v202
    %v357 = vunpack.c.h.b16 %v202
    %v358 = vunpack.c.l.b16 %v203
    %v359 = vunpack.c.h.b16 %v203
    %v360 = vunpack.c.l.b16 %v204
    %v361 = vunpack.c.h.b16 %v204
    %v362 = vunpack.c.l.b16 %v205
    %v363 = vunpack.c.h.b16 %v205
    %v364 = vunpack.c.l.b16 %v206
    %v365 = vunpack.c.h.b16 %v206
    %v366 = vunpack.c.l.b16 %v207
    %v367 = vunpack.c.h.b16 %v207
    %v368 = vunpack.c.l.b16 %v208
    %v369 = vunpack.c.h.b16 %v208
    %v370 = vunpack.c.l.b16 %v209
    %v371 = vunpack.c.h.b16 %v209
    %v372 = vunpack.c.l.b16 %v210
    %v373 = vunpack.c.h.b16 %v210
    %v374 = vunpack.c.l.b16 %v211
    %v375 = vunpack.c.h.b16 %v211
    %v376 = vunpack.c.l.b16 %v212
    %v377 = vunpack.c.h.b16 %v212
    %v378 = vunpack.c.l.b16 %v213
    %v379 = vunpack.c.h.b16 %v213
    %v380 = vunpack.c.l.b16 %v214
    %v381 = vunpack.c.h.b16 %v214
    %v382 = vunpack.c.l.b16 %v215
    %v383 = vunpack.c.h.b16 %v215
    %v384 = vunpack.c.l.b16 %v216
    %v385 = vunpack.c.h.b16 %v216
    %v386 = vunpack.c.l.b16 %v217
    %v387 = vunpack.c.h.b16 %v217
    %v388 = vunpack.c.l.b16 %v218
    %v389 = vunpack.c.h.b16 %v218
    %v390 = vunpack.c.l.b16 %v219
    %v391 = vunpack.c.h.b16 %v219
    %v392 = vunpack.c.l.b16 %v220
    %v393 = vunpack.c.h.b16 %v220
    %v394 = vunpack.c.l.b16 %v221
    %v395 = vunpack.c.h.b16 %v221
    %v396 = vunpack.c.l.b16 %v222
    %v397 = vunpack.c.h.b16 %v222
    %v398 = vunpack.c.l.b16 %v223
    %v399 = vunpack.c.h.b16 %v223
    %v400 = vunpack.c.l.b16 %v224
    %v401 = vunpack.c.h.b16 %v224
    %v402 = vunpack.c.l.b16 %v225
    %v403 = vunpack.c.h.b16 %v225
    %v404 = vunpack.c.l.b16 %v226
    %v405 = vunpack.c.h.b16 %v226
    %v406 = vunpack.c.l.b16 %v227
    %v407 = vunpack.c.h.b16 %v227
    %v408 = vunpack.c.l.b16 %v228
    %v409 = vunpack.c.h.b16 %v228
    %v410 = vunpack.c.l.b16 %v229
    %v411 = vunpack.c.h.b16 %v229
    %v412 = vunpack.c.l.b16 %v230
    %v413 = vunpack.c.h.b16 %v230
    %v414 = vunpack.c.l.b16 %v231
    %v415 = vunpack.c.h.b16 %v231
    %v416 = vunpack.c.l.b16 %v232
    %v417 = vunpack.c.h.b16 %v232
    %v418 = vunpack.c.l.b16 %v233
    %v419 = vunpack.c.h.b16 %v233
    %v420 = vunpack.c.l.b16 %v234
    %v421 = vunpack.c.h.b16 %v234
    %v422 = vunpack.c.l.b16 %v235
    %v423 = vunpack.c.h.b16 %v235
    %v424 = vunpack.c.l.b16 %v236
    %v425 = vunpack.c.h.b16 %v236
    %v426 = vunpack.c.l.b16 %v237
    %v427 = vunpack.c.h.b16 %v237
    %v428 = vunpack.c.l.b16 %v238
    %v429 = vunpack.c.h.b16 %v238
    %v430 = vunpack.c.l.b16 %v239
    %v431 = vunpack.c.h.b16 %v239
    %v432 = vunpack.c.l.b16 %v240
    %v433 = vunpack.c.h.b16 %v240
    %v434 = vunpack.c.l.b16 %v241
    %v435 = vunpack.c.h.b16 %v241
    %v436 = vunpack.c.l.b16 %v242
    %v437 = vunpack.c.h.b16 %v242
    %v438 = vunpack.c.l.b16 %v243
    %v439 = vunpack.c.h.b16 %v243
    %v440 = vunpack.c.l.b16 %v244
    %v441 = vunpack.c.h.b16 %v244
    %v442 = vunpack.c.l.b16 %v245
    %v443 = vunpack.c.h.b16 %v245
    %v444 = vunpack.c.l.b16 %v246
    %v445 = vunpack.c.h.b16 %v246
    %v446 = vunpack.c.l.b16 %v247
    %v447 = vunpack.c.h.b16 %v247
    %v448 = vunpack.c.l.b16 %v248
    %v449 = vunpack.c.h.b16 %v248
    %v450 = vunpack.c.l.b16 %v249
    %v451 = vunpack.c.h.b16 %v249
    %v452 = vunpack.c.l.b16 %v250
    %v453 = vunpack.c.h.b16 %v250
    %v454 = vunpack.c.l.b16 %v251
    %v455 = vunpack.c.h.b16 %v251
    %v456 = vunpack.c.l.b16 %v252
    %v457 = vunpack.c.h.b16 %v252
    %v458 = vunpack.c.l.b16 %v253
    %v459 = vunpack.c.h.b16 %v253
    %v460 = vunpack.c.l.b16 %v254
    %v461 = vunpack.c.h.b16 %v254
    %v462 = vunpack.c.l.b16 %v255
    %v463 = vunpack.c.h.b16 %v255
    %v464 = vunpack.c.l.b16 %v256
    %v465 = vunpack.c.h.b16 %v256
    %v466 = vunpack.c.l.b16 %v257
    %v467 = vunpack.c.h.b16 %v257
    %v468 = vunpack.c.l.b16 %v258
    %v469 = vunpack.c.h.b16 %v258
    %v470 = vunpack.c.l.b16 %v259
    %v471 = vunpack.c.h.b16 %v259
    %v472 = vunpack.c.l.b16 %v260
    %v473 = vunpack.c.h.b16 %v260
    %v474 = vunpack.c.l.b16 %v261
    %v475 = vunpack.c.h.b16 %v261
    %v476 = vpack.c.b16 %v352, %v348
    %v477 = vpack.c.b16 %v353, %v349
    %v478 = vpack.c.b16 %v354, %v350
    %v479 = vpack.c.b16 %v355, %v351
    %v480 = vpack.c.b16 %v360, %v356
    %v481 = vpack.c.b16 %v361, %v357
    %v482 = vpack.c.b16 %v362, %v358
    %v483 = vpack.c.b16 %v363, %v359
    %v484 = vpack.c.b16 %v368, %v364
    %v485 = vpack.c.b16 %v369, %v365
    %v486 = vpack.c.b16 %v370, %v366
    %v487 = vpack.c.b16 %v371, %v367
    %v488 = vpack.c.b16 %v376, %v372
    %v489 = vpack.c.b16 %v377, %v373
    %v490 = vpack.c.b16 %v378, %v374
    %v491 = vpack.c.b16 %v379, %v375
    %v492 = vpack.c.b16 %v384, %v380
    %v493 = vpack.c.b16 %v385, %v381
    %v494 = vpack.c.b16 %v386, %v382
    %v495 = vpack.c.b16 %v387, %v383
    %v496 = vpack.c.b16 %v392, %v388
    %v497 = vpack.c.b16 %v393, %v389
    %v498 = vpack.c.b16 %v394, %v390
    %v499 = vpack.c.b16 %v395, %v391
    %v500 = vpack.c.b16 %v400, %v396
    %v501 = vpack.c.b16 %v401, %v397
    %v502 = vpack.c.b16 %v402, %v398
    %v503 = vpack.c.b16 %v403, %v399
    %v504 = vpack.c.b16 %v408, %v404
    %v505 = vpack.c.b16 %v409, %v405
    %v506 = vpack.c.b16 %v410, %v406
    %v507 = vpack.c.b16 %v411, %v407
    %v508 = vpack.c.b16 %v416, %v412
    %v509 = vpack.c.b16 %v417, %v413
    %v510 = vpack.c.b16 %v418, %v414
    %v511 = vpack.c.b16 %v419, %v415
    %v512 = vpack.c.b16 %v424, %v420
    %v513 = vpack.c.b16 %v425, %v421
    %v514 = vpack.c.b16 %v426, %v422
    %v515 = vpack.c.b16 %v427, %v423
    %v516 = vpack.c.b16 %v432, %v428
    %v517 = vpack.c.b16 %v433, %v429
    %v518 = vpack.c.b16 %v434, %v430
    %v519 = vpack.c.b16 %v435, %v431
    %v520 = vpack.c.b16 %v440, %v436
    %v521 = vpack.c.b16 %v441, %v437
    %v522 = vpack.c.b16 %v442, %v438
    %v523 = vpack.c.b16 %v443, %v439
    %v524 = vpack.c.b16 %v448, %v444
    %v525 = vpack.c.b16 %v449, %v445
    %v526 = vpack.c.b16 %v450, %v446
    %v527 = vpack.c.b16 %v451, %v447
    %v528 = vpack.c.b16 %v456, %v452
    %v529 = vpack.c.b16 %v457, %v453
    %v530 = vpack.c.b16 %v458, %v454
    %v531 = vpack.c.b16 %v459, %v455
    %v532 = vpack.c.b16 %v464, %v460
    %v533 = vpack.c.b16 %v465, %v461
    %v534 = vpack.c.b16 %v466, %v462
    %v535 = vpack.c.b16 %v467, %v463
    %v536 = vpack.c.b16 %v472, %v468
    %v537 = vpack.c.b16 %v473, %v469
    %v538 = vpack.c.b16 %v474, %v470
    %v539 = vpack.c.b16 %v475, %v471
    %604 = vmatprep.subr.bf16.mxu0 %v505
    %605 = vmatpush1.bf16.msra.mxu0 %v504
    %606 = vmatprep.subr.bf16.mxu0 %v501
    %607 = vmatpush1.bf16.msra.mxu0 %v500
    %608 = vmatprep.subr.bf16.mxu0 %v497
    %609 = vmatpush1.bf16.msra.mxu0 %v496
    %610 = vmatprep.subr.bf16.mxu0 %v493
    %611 = vmatpush1.bf16.msra.mxu0 %v492
    %612 = vmatprep.subr.bf16.mxu0 %v489
    %613 = vmatpush1.bf16.msra.mxu0 %v488
    %614 = vmatprep.subr.bf16.mxu0 %v485
    %615 = vmatpush1.bf16.msra.mxu0 %v484
    %616 = vmatprep.subr.bf16.mxu0 %v481
    %617 = vmatpush1.bf16.msra.mxu0 %v480
    %618 = vmatprep.subr.bf16.mxu0 %v477
    %619 = vmatpush1.bf16.msra.mxu0 %v476
    %620 = vmatprep.subr.bf16.mxu0 %v537
    %621 = vmatpush2.bf16.msra.mxu0 %v536
    %622 = vmatprep.subr.bf16.mxu0 %v533
    %623 = vmatpush2.bf16.msra.mxu0 %v532
    %624 = vmatprep.subr.bf16.mxu0 %v529
    %625 = vmatpush2.bf16.msra.mxu0 %v528
    %626 = vmatprep.subr.bf16.mxu0 %v525
    %627 = vmatpush2.bf16.msra.mxu0 %v524
    %628 = vmatprep.subr.bf16.mxu0 %v521
    %629 = vmatpush2.bf16.msra.mxu0 %v520
    %630 = vmatprep.subr.bf16.mxu0 %v517
    %631 = vmatpush2.bf16.msra.mxu0 %v516
    %632 = vmatprep.subr.bf16.mxu0 %v513
    %633 = vmatpush2.bf16.msra.mxu0 %v512
    %634 = vmatprep.subr.bf16.mxu0 %v509
    %635 = vmatpush2.bf16.msra.mxu0 %v508
    %636 = vmatprep.mubr.bf16.mxu0 %v197
    %637 = vmatmul.mubr.bf16.gmra.mxu0 %v196
    %v638 = vpop.f32.mrf.mxu0
    %v639 = vadd.f32 %v267, %v638
    %v640 = vpop.f32.mrf.mxu0
    %v641 = vadd.f32 %v271, %v640
    %v642 = vpop.f32.mrf.mxu0
    %v643 = vpop.f32.mrf.mxu0
    %644 = vdwg.mxu0
    %645 = vmatprep.subr.bf16.mxu0 %v507
    %646 = vmatpush1.bf16.msra.mxu0 %v506
    %647 = vmatprep.subr.bf16.mxu0 %v503
    %648 = vmatpush1.bf16.msra.mxu0 %v502
    %649 = vmatprep.subr.bf16.mxu0 %v499
    %650 = vmatpush1.bf16.msra.mxu0 %v498
    %651 = vmatprep.subr.bf16.mxu0 %v495
    %652 = vmatpush1.bf16.msra.mxu0 %v494
    %653 = vmatprep.subr.bf16.mxu0 %v491
    %654 = vmatpush1.bf16.msra.mxu0 %v490
    %655 = vmatprep.subr.bf16.mxu0 %v487
    %656 = vmatpush1.bf16.msra.mxu0 %v486
    %657 = vmatprep.subr.bf16.mxu0 %v483
    %658 = vmatpush1.bf16.msra.mxu0 %v482
    %659 = vmatprep.subr.bf16.mxu0 %v479
    %660 = vmatpush1.bf16.msra.mxu0 %v478
    %661 = vmatprep.subr.bf16.mxu0 %v539
    %662 = vmatpush2.bf16.msra.mxu0 %v538
    %663 = vmatprep.subr.bf16.mxu0 %v535
    %664 = vmatpush2.bf16.msra.mxu0 %v534
    %665 = vmatprep.subr.bf16.mxu0 %v531
    %666 = vmatpush2.bf16.msra.mxu0 %v530
    %667 = vmatprep.subr.bf16.mxu0 %v527
    %668 = vmatpush2.bf16.msra.mxu0 %v526
    %669 = vmatprep.subr.bf16.mxu0 %v523
    %670 = vmatpush2.bf16.msra.mxu0 %v522
    %671 = vmatprep.subr.bf16.mxu0 %v519
    %672 = vmatpush2.bf16.msra.mxu0 %v518
    %673 = vmatprep.subr.bf16.mxu0 %v515
    %674 = vmatpush2.bf16.msra.mxu0 %v514
    %675 = vmatprep.subr.bf16.mxu0 %v511
    %676 = vmatpush2.bf16.msra.mxu0 %v510
    %677 = vmatprep.mubr.bf16.mxu0 %v197
    %678 = vmatmul.mubr.bf16.gmra.mxu0 %v196
    %v679 = vpop.f32.mrf.mxu0
    %v680 = vadd.f32 %v275, %v679
    %v681 = vpop.f32.mrf.mxu0
    %v682 = vadd.f32 %v279, %v681
    %v683 = vpop.f32.mrf.mxu0
    %v684 = vpop.f32.mrf.mxu0
    %685 = vdwg.mxu0
    %v686 = vmax.f32 %v639, 0.0
    %v687 = vmax.f32 %v641, 0.0
    %v688 = vmax.f32 %v680, 0.0
    %v689 = vmax.f32 %v682, 0.0
    %v690 = vpack.c.bf16 %v686, %v686
    %v691 = vpack.c.bf16 %v687, %v687
    %v692 = vpack.c.bf16 %v688, %v688
    %v693 = vpack.c.bf16 %v689, %v689
    %v694 = vld [vmem:[#allocation7] sm:$0xff]
    %v695 = vld [vmem:[#allocation7 + $0x8] sm:$0xff]
    %v696 = vld [vmem:[#allocation7 + $0x10] sm:$0xff]
    %v697 = vld [vmem:[#allocation7 + $0x18] sm:$0xff]
    %v698 = vld [vmem:[#allocation7 + $0x20] sm:$0xff]
    %v699 = vld [vmem:[#allocation7 + $0x28] sm:$0xff]
    %v700 = vld [vmem:[#allocation7 + $0x30] sm:$0xff]
    %v701 = vld [vmem:[#allocation7 + $0x38] sm:$0xff]
    %v702 = vld [vmem:[#allocation7 + $0x40] sm:$0xff]
    %v703 = vld [vmem:[#allocation7 + $0x48] sm:$0xff]
    %v704 = vld [vmem:[#allocation7 + $0x50] sm:$0xff]
    %v705 = vld [vmem:[#allocation7 + $0x58] sm:$0xff]
    %v706 = vld [vmem:[#allocation7 + $0x60] sm:$0xff]
    %v707 = vld [vmem:[#allocation7 + $0x68] sm:$0xff]
    %v708 = vld [vmem:[#allocation7 + $0x70] sm:$0xff]
    %v709 = vld [vmem:[#allocation7 + $0x78] sm:$0xff]
    %v710 = vld [vmem:[#allocation7 + $0x80] sm:$0xff]
    %v711 = vld [vmem:[#allocation7 + $0x88] sm:$0xff]
    %v712 = vld [vmem:[#allocation7 + $0x90] sm:$0xff]
    %v713 = vld [vmem:[#allocation7 + $0x98] sm:$0xff]
    %v714 = vld [vmem:[#allocation7 + $0xa0] sm:$0xff]
    %v715 = vld [vmem:[#allocation7 + $0xa8] sm:$0xff]
    %v716 = vld [vmem:[#allocation7 + $0xb0] sm:$0xff]
    %v717 = vld [vmem:[#allocation7 + $0xb8] sm:$0xff]
    %v718 = vld [vmem:[#allocation7 + $0xc0] sm:$0xff]
    %v719 = vld [vmem:[#allocation7 + $0xc8] sm:$0xff]
    %v720 = vld [vmem:[#allocation7 + $0xd0] sm:$0xff]
    %v721 = vld [vmem:[#allocation7 + $0xd8] sm:$0xff]
    %v722 = vld [vmem:[#allocation7 + $0xe0] sm:$0xff]
    %v723 = vld [vmem:[#allocation7 + $0xe8] sm:$0xff]
    %v724 = vld [vmem:[#allocation7 + $0xf0] sm:$0xff]
    %v725 = vld [vmem:[#allocation7 + $0xf8] sm:$0xff]
    %v726 = vld [vmem:[#allocation7 + $0x100] sm:$0xff]
    %v727 = vld [vmem:[#allocation7 + $0x108] sm:$0xff]
    %v728 = vld [vmem:[#allocation7 + $0x110] sm:$0xff]
    %v729 = vld [vmem:[#allocation7 + $0x118] sm:$0xff]
    %v730 = vld [vmem:[#allocation7 + $0x120] sm:$0xff]
    %v731 = vld [vmem:[#allocation7 + $0x128] sm:$0xff]
    %v732 = vld [vmem:[#allocation7 + $0x130] sm:$0xff]
    %v733 = vld [vmem:[#allocation7 + $0x138] sm:$0xff]
    %v734 = vld [vmem:[#allocation7 + $0x140] sm:$0xff]
    %v735 = vld [vmem:[#allocation7 + $0x148] sm:$0xff]
    %v736 = vld [vmem:[#allocation7 + $0x150] sm:$0xff]
    %v737 = vld [vmem:[#allocation7 + $0x158] sm:$0xff]
    %v738 = vld [vmem:[#allocation7 + $0x160] sm:$0xff]
    %v739 = vld [vmem:[#allocation7 + $0x168] sm:$0xff]
    %v740 = vld [vmem:[#allocation7 + $0x170] sm:$0xff]
    %v741 = vld [vmem:[#allocation7 + $0x178] sm:$0xff]
    %v742 = vld [vmem:[#allocation7 + $0x180] sm:$0xff]
    %v743 = vld [vmem:[#allocation7 + $0x188] sm:$0xff]
    %v744 = vld [vmem:[#allocation7 + $0x190] sm:$0xff]
    %v745 = vld [vmem:[#allocation7 + $0x198] sm:$0xff]
    %v746 = vld [vmem:[#allocation7 + $0x1a0] sm:$0xff]
    %v747 = vld [vmem:[#allocation7 + $0x1a8] sm:$0xff]
    %v748 = vld [vmem:[#allocation7 + $0x1b0] sm:$0xff]
    %v749 = vld [vmem:[#allocation7 + $0x1b8] sm:$0xff]
    %v750 = vld [vmem:[#allocation7 + $0x1c0] sm:$0xff]
    %v751 = vld [vmem:[#allocation7 + $0x1c8] sm:$0xff]
    %v752 = vld [vmem:[#allocation7 + $0x1d0] sm:$0xff]
    %v753 = vld [vmem:[#allocation7 + $0x1d8] sm:$0xff]
    %v754 = vld [vmem:[#allocation7 + $0x1e0] sm:$0xff]
    %v755 = vld [vmem:[#allocation7 + $0x1e8] sm:$0xff]
    %v756 = vld [vmem:[#allocation7 + $0x1f0] sm:$0xff]
    %v757 = vld [vmem:[#allocation7 + $0x1f8] sm:$0xff]
    %v758 = vld [vmem:[%s6] sm:$0x3]
    %v760 = vlaneseq
    %v761 = vshrl.u32 %v760, 7
    %v762 = vsub.s32 0, %v761
    %v763 = vrot.slane %v758, %v762
    %v764 = vlaneseq
    %v765 = vshrl.u32 %v764, 7
    %v766 = vsub.s32 1, %v765
    %v767 = vrot.slane %v758, %v766
    %v834 = vunpack.c.l.b16 %v694
    %v835 = vunpack.c.h.b16 %v694
    %v836 = vunpack.c.l.b16 %v695
    %v837 = vunpack.c.h.b16 %v695
    %v838 = vunpack.c.l.b16 %v696
    %v839 = vunpack.c.h.b16 %v696
    %v840 = vunpack.c.l.b16 %v697
    %v841 = vunpack.c.h.b16 %v697
    %v842 = vunpack.c.l.b16 %v698
    %v843 = vunpack.c.h.b16 %v698
    %v844 = vunpack.c.l.b16 %v699
    %v845 = vunpack.c.h.b16 %v699
    %v846 = vunpack.c.l.b16 %v700
    %v847 = vunpack.c.h.b16 %v700
    %v848 = vunpack.c.l.b16 %v701
    %v849 = vunpack.c.h.b16 %v701
    %v850 = vunpack.c.l.b16 %v702
    %v851 = vunpack.c.h.b16 %v702
    %v852 = vunpack.c.l.b16 %v703
    %v853 = vunpack.c.h.b16 %v703
    %v854 = vunpack.c.l.b16 %v704
    %v855 = vunpack.c.h.b16 %v704
    %v856 = vunpack.c.l.b16 %v705
    %v857 = vunpack.c.h.b16 %v705
    %v858 = vunpack.c.l.b16 %v706
    %v859 = vunpack.c.h.b16 %v706
    %v860 = vunpack.c.l.b16 %v707
    %v861 = vunpack.c.h.b16 %v707
    %v862 = vunpack.c.l.b16 %v708
    %v863 = vunpack.c.h.b16 %v708
    %v864 = vunpack.c.l.b16 %v709
    %v865 = vunpack.c.h.b16 %v709
    %v866 = vunpack.c.l.b16 %v710
    %v867 = vunpack.c.h.b16 %v710
    %v868 = vunpack.c.l.b16 %v711
    %v869 = vunpack.c.h.b16 %v711
    %v870 = vunpack.c.l.b16 %v712
    %v871 = vunpack.c.h.b16 %v712
    %v872 = vunpack.c.l.b16 %v713
    %v873 = vunpack.c.h.b16 %v713
    %v874 = vunpack.c.l.b16 %v714
    %v875 = vunpack.c.h.b16 %v714
    %v876 = vunpack.c.l.b16 %v715
    %v877 = vunpack.c.h.b16 %v715
    %v878 = vunpack.c.l.b16 %v716
    %v879 = vunpack.c.h.b16 %v716
    %v880 = vunpack.c.l.b16 %v717
    %v881 = vunpack.c.h.b16 %v717
    %v882 = vunpack.c.l.b16 %v718
    %v883 = vunpack.c.h.b16 %v718
    %v884 = vunpack.c.l.b16 %v719
    %v885 = vunpack.c.h.b16 %v719
    %v886 = vunpack.c.l.b16 %v720
    %v887 = vunpack.c.h.b16 %v720
    %v888 = vunpack.c.l.b16 %v721
    %v889 = vunpack.c.h.b16 %v721
    %v890 = vunpack.c.l.b16 %v722
    %v891 = vunpack.c.h.b16 %v722
    %v892 = vunpack.c.l.b16 %v723
    %v893 = vunpack.c.h.b16 %v723
    %v894 = vunpack.c.l.b16 %v724
    %v895 = vunpack.c.h.b16 %v724
    %v896 = vunpack.c.l.b16 %v725
    %v897 = vunpack.c.h.b16 %v725
    %v898 = vunpack.c.l.b16 %v726
    %v899 = vunpack.c.h.b16 %v726
    %v900 = vunpack.c.l.b16 %v727
    %v901 = vunpack.c.h.b16 %v727
    %v902 = vunpack.c.l.b16 %v728
    %v903 = vunpack.c.h.b16 %v728
    %v904 = vunpack.c.l.b16 %v729
    %v905 = vunpack.c.h.b16 %v729
    %v906 = vunpack.c.l.b16 %v730
    %v907 = vunpack.c.h.b16 %v730
    %v908 = vunpack.c.l.b16 %v731
    %v909 = vunpack.c.h.b16 %v731
    %v910 = vunpack.c.l.b16 %v732
    %v911 = vunpack.c.h.b16 %v732
    %v912 = vunpack.c.l.b16 %v733
    %v913 = vunpack.c.h.b16 %v733
    %v914 = vunpack.c.l.b16 %v734
    %v915 = vunpack.c.h.b16 %v734
    %v916 = vunpack.c.l.b16 %v735
    %v917 = vunpack.c.h.b16 %v735
    %v918 = vunpack.c.l.b16 %v736
    %v919 = vunpack.c.h.b16 %v736
    %v920 = vunpack.c.l.b16 %v737
    %v921 = vunpack.c.h.b16 %v737
    %v922 = vunpack.c.l.b16 %v738
    %v923 = vunpack.c.h.b16 %v738
    %v924 = vunpack.c.l.b16 %v739
    %v925 = vunpack.c.h.b16 %v739
    %v926 = vunpack.c.l.b16 %v740
    %v927 = vunpack.c.h.b16 %v740
    %v928 = vunpack.c.l.b16 %v741
    %v929 = vunpack.c.h.b16 %v741
    %v930 = vunpack.c.l.b16 %v742
    %v931 = vunpack.c.h.b16 %v742
    %v932 = vunpack.c.l.b16 %v743
    %v933 = vunpack.c.h.b16 %v743
    %v934 = vunpack.c.l.b16 %v744
    %v935 = vunpack.c.h.b16 %v744
    %v936 = vunpack.c.l.b16 %v745
    %v937 = vunpack.c.h.b16 %v745
    %v938 = vunpack.c.l.b16 %v746
    %v939 = vunpack.c.h.b16 %v746
    %v940 = vunpack.c.l.b16 %v747
    %v941 = vunpack.c.h.b16 %v747
    %v942 = vunpack.c.l.b16 %v748
    %v943 = vunpack.c.h.b16 %v748
    %v944 = vunpack.c.l.b16 %v749
    %v945 = vunpack.c.h.b16 %v749
    %v946 = vunpack.c.l.b16 %v750
    %v947 = vunpack.c.h.b16 %v750
    %v948 = vunpack.c.l.b16 %v751
    %v949 = vunpack.c.h.b16 %v751
    %v950 = vunpack.c.l.b16 %v752
    %v951 = vunpack.c.h.b16 %v752
    %v952 = vunpack.c.l.b16 %v753
    %v953 = vunpack.c.h.b16 %v753
    %v954 = vunpack.c.l.b16 %v754
    %v955 = vunpack.c.h.b16 %v754
    %v956 = vunpack.c.l.b16 %v755
    %v957 = vunpack.c.h.b16 %v755
    %v958 = vunpack.c.l.b16 %v756
    %v959 = vunpack.c.h.b16 %v756
    %v960 = vunpack.c.l.b16 %v757
    %v961 = vunpack.c.h.b16 %v757
    %v962 = vpack.c.b16 %v836, %v834
    %v963 = vpack.c.b16 %v837, %v835
    %v964 = vpack.c.b16 %v840, %v838
    %v965 = vpack.c.b16 %v841, %v839
    %v966 = vpack.c.b16 %v844, %v842
    %v967 = vpack.c.b16 %v845, %v843
    %v968 = vpack.c.b16 %v848, %v846
    %v969 = vpack.c.b16 %v849, %v847
    %v970 = vpack.c.b16 %v852, %v850
    %v971 = vpack.c.b16 %v853, %v851
    %v972 = vpack.c.b16 %v856, %v854
    %v973 = vpack.c.b16 %v857, %v855
    %v974 = vpack.c.b16 %v860, %v858
    %v975 = vpack.c.b16 %v861, %v859
    %v976 = vpack.c.b16 %v864, %v862
    %v977 = vpack.c.b16 %v865, %v863
    %v978 = vpack.c.b16 %v868, %v866
    %v979 = vpack.c.b16 %v869, %v867
    %v980 = vpack.c.b16 %v872, %v870
    %v981 = vpack.c.b16 %v873, %v871
    %v982 = vpack.c.b16 %v876, %v874
    %v983 = vpack.c.b16 %v877, %v875
    %v984 = vpack.c.b16 %v880, %v878
    %v985 = vpack.c.b16 %v881, %v879
    %v986 = vpack.c.b16 %v884, %v882
    %v987 = vpack.c.b16 %v885, %v883
    %v988 = vpack.c.b16 %v888, %v886
    %v989 = vpack.c.b16 %v889, %v887
    %v990 = vpack.c.b16 %v892, %v890
    %v991 = vpack.c.b16 %v893, %v891
    %v992 = vpack.c.b16 %v896, %v894
    %v993 = vpack.c.b16 %v897, %v895
    %v994 = vpack.c.b16 %v900, %v898
    %v995 = vpack.c.b16 %v901, %v899
    %v996 = vpack.c.b16 %v904, %v902
    %v997 = vpack.c.b16 %v905, %v903
    %v998 = vpack.c.b16 %v908, %v906
    %v999 = vpack.c.b16 %v909, %v907
    %v1000 = vpack.c.b16 %v912, %v910
    %v1001 = vpack.c.b16 %v913, %v911
    %v1002 = vpack.c.b16 %v916, %v914
    %v1003 = vpack.c.b16 %v917, %v915
    %v1004 = vpack.c.b16 %v920, %v918
    %v1005 = vpack.c.b16 %v921, %v919
    %v1006 = vpack.c.b16 %v924, %v922
    %v1007 = vpack.c.b16 %v925, %v923
    %v1008 = vpack.c.b16 %v928, %v926
    %v1009 = vpack.c.b16 %v929, %v927
    %v1010 = vpack.c.b16 %v932, %v930
    %v1011 = vpack.c.b16 %v933, %v931
    %v1012 = vpack.c.b16 %v936, %v934
    %v1013 = vpack.c.b16 %v937, %v935
    %v1014 = vpack.c.b16 %v940, %v938
    %v1015 = vpack.c.b16 %v941, %v939
    %v1016 = vpack.c.b16 %v944, %v942
    %v1017 = vpack.c.b16 %v945, %v943
    %v1018 = vpack.c.b16 %v948, %v946
    %v1019 = vpack.c.b16 %v949, %v947
    %v1020 = vpack.c.b16 %v952, %v950
    %v1021 = vpack.c.b16 %v953, %v951
    %v1022 = vpack.c.b16 %v956, %v954
    %v1023 = vpack.c.b16 %v957, %v955
    %v1024 = vpack.c.b16 %v960, %v958
    %v1025 = vpack.c.b16 %v961, %v959
    %1090 = vmatprep.subr.bf16.mxu0 %v977
    %1091 = vmatpush1.bf16.msra.mxu0 %v976
    %1092 = vmatprep.subr.bf16.mxu0 %v975
    %1093 = vmatpush1.bf16.msra.mxu0 %v974
    %1094 = vmatprep.subr.bf16.mxu0 %v973
    %1095 = vmatpush1.bf16.msra.mxu0 %v972
    %1096 = vmatprep.subr.bf16.mxu0 %v971
    %1097 = vmatpush1.bf16.msra.mxu0 %v970
    %1098 = vmatprep.subr.bf16.mxu0 %v969
    %1099 = vmatpush1.bf16.msra.mxu0 %v968
    %1100 = vmatprep.subr.bf16.mxu0 %v967
    %1101 = vmatpush1.bf16.msra.mxu0 %v966
    %1102 = vmatprep.subr.bf16.mxu0 %v965
    %1103 = vmatpush1.bf16.msra.mxu0 %v964
    %1104 = vmatprep.subr.bf16.mxu0 %v963
    %1105 = vmatpush1.bf16.msra.mxu0 %v962
    %1106 = vmatprep.subr.bf16.mxu0 %v993
    %1107 = vmatpush2.bf16.msra.mxu0 %v992
    %1108 = vmatprep.subr.bf16.mxu0 %v991
    %1109 = vmatpush2.bf16.msra.mxu0 %v990
    %1110 = vmatprep.subr.bf16.mxu0 %v989
    %1111 = vmatpush2.bf16.msra.mxu0 %v988
    %1112 = vmatprep.subr.bf16.mxu0 %v987
    %1113 = vmatpush2.bf16.msra.mxu0 %v986
    %1114 = vmatprep.subr.bf16.mxu0 %v985
    %1115 = vmatpush2.bf16.msra.mxu0 %v984
    %1116 = vmatprep.subr.bf16.mxu0 %v983
    %1117 = vmatpush2.bf16.msra.mxu0 %v982
    %1118 = vmatprep.subr.bf16.mxu0 %v981
    %1119 = vmatpush2.bf16.msra.mxu0 %v980
    %1120 = vmatprep.subr.bf16.mxu0 %v979
    %1121 = vmatpush2.bf16.msra.mxu0 %v978
    %1122 = vmatprep.mubr.bf16.mxu0 %v691
    %1123 = vmatmul.mubr.bf16.gmra.mxu0 %v690
    %v1124 = vpop.f32.mrf.mxu0
    %v1125 = vadd.f32 %v763, %v1124
    %v1126 = vpop.f32.mrf.mxu0
    %v1127 = vadd.f32 %v767, %v1126
    %v1128 = vpop.f32.mrf.mxu0
    %v1129 = vpop.f32.mrf.mxu0
    %1130 = vdwg.mxu0
    %1131 = vmatprep.subr.bf16.mxu0 %v1009
    %1132 = vmatpush1.bf16.msra.mxu0 %v1008
    %1133 = vmatprep.subr.bf16.mxu0 %v1007
    %1134 = vmatpush1.bf16.msra.mxu0 %v1006
    %1135 = vmatprep.subr.bf16.mxu0 %v1005
    %1136 = vmatpush1.bf16.msra.mxu0 %v1004
    %1137 = vmatprep.subr.bf16.mxu0 %v1003
    %1138 = vmatpush1.bf16.msra.mxu0 %v1002
    %1139 = vmatprep.subr.bf16.mxu0 %v1001
    %1140 = vmatpush1.bf16.msra.mxu0 %v1000
    %1141 = vmatprep.subr.bf16.mxu0 %v999
    %1142 = vmatpush1.bf16.msra.mxu0 %v998
    %1143 = vmatprep.subr.bf16.mxu0 %v997
    %1144 = vmatpush1.bf16.msra.mxu0 %v996
    %1145 = vmatprep.subr.bf16.mxu0 %v995
    %1146 = vmatpush1.bf16.msra.mxu0 %v994
    %1147 = vmatprep.subr.bf16.mxu0 %v1025
    %1148 = vmatpush2.bf16.msra.mxu0 %v1024
    %1149 = vmatprep.subr.bf16.mxu0 %v1023
    %1150 = vmatpush2.bf16.msra.mxu0 %v1022
    %1151 = vmatprep.subr.bf16.mxu0 %v1021
    %1152 = vmatpush2.bf16.msra.mxu0 %v1020
    %1153 = vmatprep.subr.bf16.mxu0 %v1019
    %1154 = vmatpush2.bf16.msra.mxu0 %v1018
    %1155 = vmatprep.subr.bf16.mxu0 %v1017
    %1156 = vmatpush2.bf16.msra.mxu0 %v1016
    %1157 = vmatprep.subr.bf16.mxu0 %v1015
    %1158 = vmatpush2.bf16.msra.mxu0 %v1014
    %1159 = vmatprep.subr.bf16.mxu0 %v1013
    %1160 = vmatpush2.bf16.msra.mxu0 %v1012
    %1161 = vmatprep.subr.bf16.mxu0 %v1011
    %1162 = vmatpush2.bf16.msra.mxu0 %v1010
    %1163 = vmatprep.mubr.bf16.mxu0 %v693
    %1164 = vmatmul.mubr.bf16.gmra.mxu0 %v692
    %v1165 = vpop.f32.mrf.mxu0
    %v1166 = vadd.f32 %v1125, %v1165
    %v1167 = vpop.f32.mrf.mxu0
    %v1168 = vadd.f32 %v1127, %v1167
    %v1169 = vpop.f32.mrf.mxu0
    %v1170 = vpop.f32.mrf.mxu0
    %1171 = vdwg.mxu0
    %v1172 = vmax.f32 %v1166, 0.0
    %v1173 = vmax.f32 %v1168, 0.0
    %v1174 = vpack.c.bf16 %v1172, %v1172
    %v1175 = vpack.c.bf16 %v1173, %v1173
    %v1176 = vld [vmem:[#allocation9] sm:$0xf]
    %v1177 = vld [vmem:[#allocation9 + $0x4] sm:$0xf]
    %v1178 = vld [vmem:[#allocation9 + $0x8] sm:$0xf]
    %v1179 = vld [vmem:[#allocation9 + $0xc] sm:$0xf]
    %v1180 = vld [vmem:[#allocation9 + $0x10] sm:$0xf]
    %v1181 = vld [vmem:[#allocation9 + $0x14] sm:$0xf]
    %v1182 = vld [vmem:[#allocation9 + $0x18] sm:$0xf]
    %v1183 = vld [vmem:[#allocation9 + $0x1c] sm:$0xf]
    %v1184 = vld [vmem:[#allocation9 + $0x20] sm:$0xf]
    %v1185 = vld [vmem:[#allocation9 + $0x24] sm:$0xf]
    %v1186 = vld [vmem:[#allocation9 + $0x28] sm:$0xf]
    %v1187 = vld [vmem:[#allocation9 + $0x2c] sm:$0xf]
    %v1188 = vld [vmem:[#allocation9 + $0x30] sm:$0xf]
    %v1189 = vld [vmem:[#allocation9 + $0x34] sm:$0xf]
    %v1190 = vld [vmem:[#allocation9 + $0x38] sm:$0xf]
    %v1191 = vld [vmem:[#allocation9 + $0x3c] sm:$0xf]
    %v1192 = vld [vmem:[#allocation9 + $0x40] sm:$0xf]
    %v1193 = vld [vmem:[#allocation9 + $0x44] sm:$0xf]
    %v1194 = vld [vmem:[#allocation9 + $0x48] sm:$0xf]
    %v1195 = vld [vmem:[#allocation9 + $0x4c] sm:$0xf]
    %v1196 = vld [vmem:[#allocation9 + $0x50] sm:$0xf]
    %v1197 = vld [vmem:[#allocation9 + $0x54] sm:$0xf]
    %v1198 = vld [vmem:[#allocation9 + $0x58] sm:$0xf]
    %v1199 = vld [vmem:[#allocation9 + $0x5c] sm:$0xf]
    %v1200 = vld [vmem:[#allocation9 + $0x60] sm:$0xf]
    %v1201 = vld [vmem:[#allocation9 + $0x64] sm:$0xf]
    %v1202 = vld [vmem:[#allocation9 + $0x68] sm:$0xf]
    %v1203 = vld [vmem:[#allocation9 + $0x6c] sm:$0xf]
    %v1204 = vld [vmem:[#allocation9 + $0x70] sm:$0xf]
    %v1205 = vld [vmem:[#allocation9 + $0x74] sm:$0xf]
    %v1206 = vld [vmem:[#allocation9 + $0x78] sm:$0xf]
    %v1207 = vld [vmem:[#allocation9 + $0x7c] sm:$0xf]
    %v1208 = vld [vmem:[%s8] sm:$0x1]
    %v1210 = vlaneseq
    %v1211 = vshrl.u32 %v1210, 7
    %v1212 = vsub.s32 0, %v1211
    %v1213 = vrot.slane %v1208, %v1212
    %v1247 = vunpack.c.l.b16 %v1176
    %v1248 = vunpack.c.l.b16 %v1177
    %v1249 = vunpack.c.l.b16 %v1178
    %v1250 = vunpack.c.l.b16 %v1179
    %v1251 = vunpack.c.l.b16 %v1180
    %v1252 = vunpack.c.l.b16 %v1181
    %v1253 = vunpack.c.l.b16 %v1182
    %v1254 = vunpack.c.l.b16 %v1183
    %v1255 = vunpack.c.l.b16 %v1184
    %v1256 = vunpack.c.l.b16 %v1185
    %v1257 = vunpack.c.l.b16 %v1186
    %v1258 = vunpack.c.l.b16 %v1187
    %v1259 = vunpack.c.l.b16 %v1188
    %v1260 = vunpack.c.l.b16 %v1189
    %v1261 = vunpack.c.l.b16 %v1190
    %v1262 = vunpack.c.l.b16 %v1191
    %v1263 = vunpack.c.l.b16 %v1192
    %v1264 = vunpack.c.l.b16 %v1193
    %v1265 = vunpack.c.l.b16 %v1194
    %v1266 = vunpack.c.l.b16 %v1195
    %v1267 = vunpack.c.l.b16 %v1196
    %v1268 = vunpack.c.l.b16 %v1197
    %v1269 = vunpack.c.l.b16 %v1198
    %v1270 = vunpack.c.l.b16 %v1199
    %v1271 = vunpack.c.l.b16 %v1200
    %v1272 = vunpack.c.l.b16 %v1201
    %v1273 = vunpack.c.l.b16 %v1202
    %v1274 = vunpack.c.l.b16 %v1203
    %v1275 = vunpack.c.l.b16 %v1204
    %v1276 = vunpack.c.l.b16 %v1205
    %v1277 = vunpack.c.l.b16 %v1206
    %v1278 = vunpack.c.l.b16 %v1207
    %v1279 = vpack.c.b16 %v1248, %v1247
    %v1280 = vpack.c.b16 %v1250, %v1249
    %v1281 = vpack.c.b16 %v1252, %v1251
    %v1282 = vpack.c.b16 %v1254, %v1253
    %v1283 = vpack.c.b16 %v1256, %v1255
    %v1284 = vpack.c.b16 %v1258, %v1257
    %v1285 = vpack.c.b16 %v1260, %v1259
    %v1286 = vpack.c.b16 %v1262, %v1261
    %v1287 = vpack.c.b16 %v1264, %v1263
    %v1288 = vpack.c.b16 %v1266, %v1265
    %v1289 = vpack.c.b16 %v1268, %v1267
    %v1290 = vpack.c.b16 %v1270, %v1269
    %v1291 = vpack.c.b16 %v1272, %v1271
    %v1292 = vpack.c.b16 %v1274, %v1273
    %v1293 = vpack.c.b16 %v1276, %v1275
    %v1294 = vpack.c.b16 %v1278, %v1277
    %1311 = vmatprep.subr.bf16.mxu0 0
    %1312 = vmatpush1.bf16.msra.mxu0 %v1286
    %1313 = vmatprep.subr.bf16.mxu0 0
    %1314 = vmatpush1.bf16.msra.mxu0 %v1285
    %1315 = vmatprep.subr.bf16.mxu0 0
    %1316 = vmatpush1.bf16.msra.mxu0 %v1284
    %1317 = vmatprep.subr.bf16.mxu0 0
    %1318 = vmatpush1.bf16.msra.mxu0 %v1283
    %1319 = vmatprep.subr.bf16.mxu0 0
    %1320 = vmatpush1.bf16.msra.mxu0 %v1282
    %1321 = vmatprep.subr.bf16.mxu0 0
    %1322 = vmatpush1.bf16.msra.mxu0 %v1281
    %1323 = vmatprep.subr.bf16.mxu0 0
    %1324 = vmatpush1.bf16.msra.mxu0 %v1280
    %1325 = vmatprep.subr.bf16.mxu0 0
    %1326 = vmatpush1.bf16.msra.mxu0 %v1279
    %1327 = vmatprep.subr.bf16.mxu0 0
    %1328 = vmatpush2.bf16.msra.mxu0 %v1294
    %1329 = vmatprep.subr.bf16.mxu0 0
    %1330 = vmatpush2.bf16.msra.mxu0 %v1293
    %1331 = vmatprep.subr.bf16.mxu0 0
    %1332 = vmatpush2.bf16.msra.mxu0 %v1292
    %1333 = vmatprep.subr.bf16.mxu0 0
    %1334 = vmatpush2.bf16.msra.mxu0 %v1291
    %1335 = vmatprep.subr.bf16.mxu0 0
    %1336 = vmatpush2.bf16.msra.mxu0 %v1290
    %1337 = vmatprep.subr.bf16.mxu0 0
    %1338 = vmatpush2.bf16.msra.mxu0 %v1289
    %1339 = vmatprep.subr.bf16.mxu0 0
    %1340 = vmatpush2.bf16.msra.mxu0 %v1288
    %1341 = vmatprep.subr.bf16.mxu0 0
    %1342 = vmatpush2.bf16.msra.mxu0 %v1287
    %1343 = vmatprep.mubr.bf16.mxu0 %v1175
    %1344 = vmatmul.mubr.bf16.gmra.mxu0 %v1174
    %v1345 = vpop.f32.mrf.mxu0
    %v1346 = vadd.f32 %v1213, %v1345
    %v1347 = vpop.f32.mrf.mxu0
    %v1348 = vpop.f32.mrf.mxu0
    %v1349 = vpop.f32.mrf.mxu0
    %1350 = vdwg.mxu0
    %vm1351 = vcmask 31744
    %1352 = vst.msk [vmem:[%s9] sm:$0xff] %vm1351, %v1346
    // Predicated region
    $region58: #{tpu_custom_call.1} parent=1 // pred_check
      _
    $region59: #{tpu_custom_call.1} parent=1 // pred_check_branch
      %1354 = sbr.rel (0) target = $region61
    $region60: #{tpu_custom_call.1} parent=1 // pred_region
      _
    $region61: #{tpu_custom_call.1} parent=1 // pred_fallthru
      _
    // Predicated region
    $region62: #{tpu_custom_call.1} parent=1 // pred_check
      _
    $region63: #{tpu_custom_call.1} parent=1 // pred_check_branch
      %1356 = sbr.rel (0) target = $region65
    $region64: #{tpu_custom_call.1} parent=1 // pred_region
      _
    $region65: #{tpu_custom_call.1} parent=1 // pred_fallthru
      _
    %1357 = vsyncpa [#allocation3], 1
    %1358 = vsyncpa [#allocation5], 1
    %1359 = vsyncpa [#allocation8], 1

</llo_original>
